<compile_context>
chip_gen: v7x
topology: tpu7x:2x2x1
jax: 0.10.0
libtpu: 0.0.40
codegen_flags: <defaults>
</compile_context>

<pallas_src>
import jax
import jax.numpy as jnp
from jax.experimental import pallas as pl
from jax.experimental.pallas import tpu as pltpu

_LANES_CANDIDATES = (512, 256, 128)      # lane-dense last dim (multiple of 128)
_TARGET_TILE_BYTES = 2 * 1024 * 1024     # ~2 MiB per tile buffer (HBM-roofline sweet spot)
_SINGLE_BLOCK_MAX_BYTES = 2 * 1024 * 1024  # below this: one grid step over the whole slab


def _relu_kernel(x_ref, o_ref):
    # Pure VPU elementwise max(x, 0) over the whole VMEM tile.
    o_ref[...] = jnp.maximum(x_ref[...], jnp.zeros((), x_ref.dtype))


def _choose_layout(total: int, itemsize: int):
    """Pick (lanes, rows, tile_rows) for a lane-dense 2-D view of `total` elems."""
    lanes = None
    for cand in _LANES_CANDIDATES:
        if total % cand == 0:
            lanes = cand
            break
    assert lanes is not None, "caller guarantees total % 128 == 0"
    rows = total // lanes
    total_bytes = total * itemsize

    # Small slab: single full-array block (exempt from the (8,128) rule), one
    # grid step -> no per-step pipeline overhead, no masked partial stores.
    if total_bytes <= _SINGLE_BLOCK_MAX_BYTES or rows <= 32:
        return lanes, rows, rows

    # Large slab: ~2 MiB tiles, rows a multiple of 32 (bf16/int8 sublane packing).
    target_rows = max(32, (_TARGET_TILE_BYTES // (lanes * itemsize)) // 32 * 32)
    target_rows = min(target_rows, (rows // 32) * 32)

    # Prefer a tile that divides rows evenly (balanced across v7x's two cores,
    # no ragged masked last tile); search a little below the target.
    tile_rows = target_rows
    for tr in range(target_rows, max(32, target_rows // 2) - 1, -32):
        if rows % tr == 0:
            tile_rows = tr
            break
    return lanes, rows, tile_rows


def _relu_slab(x2d: jax.Array, tile_rows: int, lanes: int) -> jax.Array:
    rows = x2d.shape[0]
    grid = (pl.cdiv(rows, tile_rows),)
    return pl.pallas_call(
        _relu_kernel,
        out_shape=jax.ShapeDtypeStruct(x2d.shape, x2d.dtype),
        grid_spec=pl.GridSpec(
            grid=grid,
            in_specs=[pl.BlockSpec((tile_rows, lanes), lambda i: (i, 0))],
            out_specs=pl.BlockSpec((tile_rows, lanes), lambda i: (i, 0)),
        ),
        compiler_params=pltpu.CompilerParams(
            dimension_semantics=("parallel",),
        ),
        # Mirror PyTorch's inplace ReLU when the caller donates the input buffer.
        input_output_aliases={0: 0},
    )(x2d)


def relu_pallas(x: jax.Array) -> jax.Array:
    """ReLU over an arbitrary-shape tensor via a lane-dense Pallas kernel."""
    orig_shape = x.shape
    total = x.size
    if total == 0:
        return x
    itemsize = x.dtype.itemsize
    flat = x.reshape(-1)

    main = (total // 128) * 128
    tail = total - main

    if main == 0:
        # Tiny tensor (< 128 elems): a kernel launch costs more than the op.
        return jnp.maximum(flat, jnp.zeros((), x.dtype)).reshape(orig_shape)

    if tail == 0:
        lanes, rows, tile_rows = _choose_layout(total, itemsize)
        out = _relu_slab(flat.reshape(rows, lanes), tile_rows, lanes).reshape(-1)
    else:
        # Ragged size: Pallas kernel on the 128-aligned prefix (no pad/copy),
        # plain max on the <128-element tail outside the kernel.
        lanes, rows, tile_rows = _choose_layout(main, itemsize)
        head = _relu_slab(flat[:main].reshape(rows, lanes), tile_rows, lanes).reshape(-1)
        tail_out = jnp.maximum(flat[main:], jnp.zeros((), x.dtype))
        out = jnp.concatenate([head, tail_out])

    return out.reshape(orig_shape)


if __name__ == "__main__":
    key = jax.random.PRNGKey(0)

    # Small shape consistent with the module's NCHW activation -> single (4, 512) block.
    x_small = jax.random.normal(key, (2, 4, 16, 16), dtype=jnp.float32)
    y_small = relu_pallas(x_small)
    jax.block_until_ready(y_small)
    assert y_small.shape == x_small.shape and y_small.dtype == x_small.dtype
    assert jnp.allclose(y_small, jnp.maximum(x_small, 0.0)), "Pallas ReLU mismatch (small)"

    # The module's actual activation shape ([1, 1024, 14, 14]) -> one (392, 512)
    # full-array block, one grid step, no padding.
    x_full = jax.random.normal(key, (1, 1024, 14, 14), dtype=jnp.float32)
    y_full = relu_pallas(x_full)
    jax.block_until_ready(y_full)
    assert y_full.shape == x_full.shape and y_full.dtype == x_full.dtype
    assert jnp.allclose(y_full, jnp.maximum(x_full, 0.0)), "Pallas ReLU mismatch (full)"

    # Ragged size (exercises the aligned-prefix + tail path, no jnp.pad).
    x_rag = jax.random.normal(key, (2, 3, 11, 13), dtype=jnp.float32)
    y_rag = relu_pallas(x_rag)
    jax.block_until_ready(y_rag)
    assert jnp.allclose(y_rag, jnp.maximum(x_rag, 0.0)), "Pallas ReLU mismatch (ragged)"

    print("KERNEL_OK")
</pallas_src>

<mosaic_0001>
module attributes {stable_mosaic.version = 11 : i64} {
  func.func @_relu_kernel(%arg0: i32, %arg1: memref<4x512xf32, #tpu.memory_space<vmem>>, %arg2: memref<4x512xf32, #tpu.memory_space<vmem>>) attributes {dimension_semantics = [#tpu.dimension_semantics<parallel>], iteration_bounds = array<i64: 1>, scalar_prefetch = 0 : i64, scratch_operands = 0 : i64, tpu.core_type = #tpu.core_type<tc>, window_params = [{transform_indices = @transform_0, window_bounds = array<i64: 4, 512>}, {transform_indices = @transform_1, window_bounds = array<i64: 4, 512>}]} {
    %c0 = arith.constant 0 : index
    %c0_0 = arith.constant 0 : index
    %0 = vector.load %arg1[%c0, %c0_0] : memref<4x512xf32, #tpu.memory_space<vmem>>, vector<4x512xf32>
    %cst = arith.constant 0.000000e+00 : f32
    %1 = vector.broadcast %cst : f32 to vector<4x512xf32>
    %2 = arith.maximumf %0, %1 : vector<4x512xf32>
    %c0_1 = arith.constant 0 : index
    %c0_2 = arith.constant 0 : index
    %3 = vector.load %arg2[%c0_1, %c0_2] : memref<4x512xf32, #tpu.memory_space<vmem>>, vector<4x512xf32>
    tpu.vector_store %arg2[%c0_1, %c0_2], %2 {strides = array<i32>} : memref<4x512xf32, #tpu.memory_space<vmem>>, vector<4x512xf32>,
    return
  }
  func.func @transform_0(%arg0: i32) -> (i32, i32) {
    %c0_i32 = arith.constant 0 : i32
    %c0_i32_0 = arith.constant 0 : i32
    return %arg0, %c0_i32 : i32, i32
  }
  func.func @transform_1(%arg0: i32) -> (i32, i32) {
    %c0_i32 = arith.constant 0 : i32
    %c0_i32_0 = arith.constant 0 : i32
    return %arg0, %c0_i32 : i32, i32
  }
}

</mosaic_0001>

<llo_original>
// kernel: tpu_custom_call.1
$region0: #{tpu_custom_call.1}
  #allocation0 [shape = 'u32[]', space=smem, size = 0x4, offset = 0x4, fixed_abs, tag = 'smem constant byte address 0x4 - core index']
  #allocation1 [shape = 'u32[144,128]{1,0:T(1,128)}', space=vmem, size = 0x12000, scoped, tag = 'internal scratch']
  %s0 = inlined_call_operand.hbm [shape: f32[4,512], index: 0, kind: input, shape index: {}, may-alias: {0,1}]
  %s1 = inlined_call_operand.hbm [shape: f32[4,512], index: 1, kind: output, shape index: {}, may-alias: {0,1}]
  %s2 = sld [smem:[#allocation0]]
  $region18: #{tpu_custom_call.1} parent=0
    _
  %s4 = ssub.s32 1, %s2
  %s5 = scalar_select 0, %s4, %s2
  $region1: #{tpu_custom_call.1} parent=0
    #allocation2 [shape = 'u8[8192]{0}', space=vmem, size = 0x2000, scoped, tag = 'input window, operand 0, single buffered']
    #allocation3 [shape = 's32[1]{0}', space=sflag, size = 0x4, scoped, tag = 'scoped memory for tpu_custom_call.1']
    #allocation4 [shape = 's32[1]{0}', space=sflag, size = 0x4, scoped, tag = 'scoped memory for tpu_custom_call.1']
    #allocation5 [shape = 'u8[8192]{0}', space=vmem, size = 0x2000, scoped, tag = 'output window, operand 0, single buffered']
    %6 = vsyncpa [#allocation3], 0
    %7 = vsyncpa [#allocation4], 0
    // Predicated region
    $region2: #{tpu_custom_call.1} parent=1 // pred_check
      _
    $region3: #{tpu_custom_call.1} parent=1 // pred_check_branch
      %9 = sbr.rel (0) target = $region5
    $region4: #{tpu_custom_call.1} parent=1 // pred_region
      %s11 = ssub.s32 256, 256
      %12 = vsyncadd [#allocation3], %s11
      %s14 = sshll.u32 [#allocation2], 4
      %s15 = int_to_ptr.vmem [resolvable:$true] %s14
      %17 = dma.hbm_to_vmem [thread:$0]  %s0, 256, %s15, [#allocation3]
    $region5: #{tpu_custom_call.1} parent=1 // pred_fallthru
      _
    // Predicated region
    $region6: #{tpu_custom_call.1} parent=1 // pred_check
      _
    $region7: #{tpu_custom_call.1} parent=1 // pred_check_branch
      %19 = sbr.rel (0) target = $region9
    $region8: #{tpu_custom_call.1} parent=1 // pred_region
      %20 = dma.done [#allocation3], 256
    $region9: #{tpu_custom_call.1} parent=1 // pred_fallthru
      _
    %v21 = vld [vmem:[#allocation2] sm:$0xff]
    %v22 = vld [vmem:[#allocation2 + $0x8] sm:$0xff]
    %v23 = vmax.f32 %v21, 0.0
    %v24 = vmax.f32 %v22, 0.0
    %25 = vst [vmem:[#allocation5] sm:$0xff] %v23
    %26 = vst [vmem:[#allocation5 + $0x8] sm:$0xff] %v24
    // Predicated region
    $region10: #{tpu_custom_call.1} parent=1 // pred_check
      _
    $region11: #{tpu_custom_call.1} parent=1 // pred_check_branch
      %28 = sbr.rel (0) target = $region13
    $region12: #{tpu_custom_call.1} parent=1 // pred_region
      %s30 = ssub.s32 256, 256
      %31 = vsyncadd [#allocation4], %s30
      %s33 = sshll.u32 [#allocation5], 4
      %s34 = int_to_ptr.vmem [resolvable:$true] %s33
      %36 = dma.vmem_to_hbm [thread:$0]  %s34, 256, %s1, [#allocation4]
    $region13: #{tpu_custom_call.1} parent=1 // pred_fallthru
      _
    // Predicated region
    $region14: #{tpu_custom_call.1} parent=1 // pred_check
      _
    $region15: #{tpu_custom_call.1} parent=1 // pred_check_branch
      %38 = sbr.rel (0) target = $region17
    $region16: #{tpu_custom_call.1} parent=1 // pred_region
      %39 = dma.done [#allocation4], 256
    $region17: #{tpu_custom_call.1} parent=1 // pred_fallthru
      _
    %40 = vsyncpa [#allocation3], 1
    %41 = vsyncpa [#allocation4], 1

</llo_original>
